<compile_context>
chip_gen: v5e
topology: v5e:2x2
jax: 0.10.0
libtpu: 0.0.40
codegen_flags: <defaults>
</compile_context>

<pallas_src>
import jax
import jax.numpy as jnp
from jax.experimental import pallas as pl
from jax.experimental.pallas import tpu as pltpu


def _round_up(x, m):
    return (x + m - 1) // m * m


def _cdiv(a, b):
    return -(-a // b)


def _vfe_kernel(feat_ref, npts_ref, sel_ref, out_ref):
    # feat_ref: (TN, M*C)   point features in natural row-major layout
    # npts_ref: (TN, 1)     int32 point counts per voxel
    # sel_ref : (M*C, F)    0/1 selection matrix: sums over M, slices first F channels
    # out_ref : (TN, F)     per-voxel mean
    s = jnp.dot(feat_ref[...].astype(jnp.float32), sel_ref[...],
                preferred_element_type=jnp.float32)            # (TN, F) sum over points (MXU)
    cnt = npts_ref[...].astype(jnp.float32)                     # (TN, 1)
    out_ref[...] = (s / cnt).astype(out_ref.dtype)              # exact divide (0-count -> inf/nan, torch parity)


def _choose_tile(N, M, C, itemsize, tile_n):
    # Cap so the double-buffered features block stays under ~12 MiB (safe for
    # v5e's 16 MiB default scoped VMEM; comfortable on v6e/v7x).
    vmem_budget = 12 * 1024 * 1024
    tile = min(int(tile_n), max(8, vmem_budget // (2 * M * C * itemsize)))
    # v7x megacore: keep >= 4 grid steps for large N so both TensorCores get work.
    if N >= 4096:
        tile = min(tile, _round_up(_cdiv(N, 4), 128))
    tile = min(tile, _round_up(N, 8))
    return max(8, (tile // 8) * 8)


def hard_simple_vfe(features, num_points, coors=None, num_features=4, tile_n=8192):
    """Pallas implementation of HardSimpleVFE.forward.

    Args:
        features:     (N, M, C) float array, C >= num_features.
        num_points:   (N,) integer number of valid points per voxel.
        coors:        unused (signature parity with the torch module).
        num_features: how many leading feature channels to average.
        tile_n:       max voxels per grid step (auto-capped for VMEM / megacore).

    Returns:
        (N, num_features) mean of points inside each voxel.
    """
    del coors  # unused by the torch forward as well
    N, M, C = features.shape
    assert num_features <= C, "num_features must not exceed feature channels"

    # Free, row-major reshape: no HBM copy.  Voxels on the sublane axis.
    feats_2d = features.reshape(N, M * C)
    npts_col = num_points.astype(jnp.int32).reshape(N, 1)

    # Constant selection/sum matrix: sel[m*C + c, f] = 1 iff c == f (f < num_features).
    sel = ((jnp.arange(M * C) % C)[:, None]
           == jnp.arange(num_features)[None, :]).astype(jnp.float32)

    tile = _choose_tile(N, M, C, jnp.dtype(features.dtype).itemsize, tile_n)
    grid = (_cdiv(N, tile),)

    out = pl.pallas_call(
        _vfe_kernel,
        out_shape=jax.ShapeDtypeStruct((N, num_features), features.dtype),
        grid_spec=pltpu.PrefetchScalarGridSpec(
            num_scalar_prefetch=0,
            grid=grid,
            in_specs=[
                pl.BlockSpec((tile, M * C), lambda i: (i, 0)),
                pl.BlockSpec((tile, 1), lambda i: (i, 0)),
                pl.BlockSpec((M * C, num_features), lambda i: (0, 0)),
            ],
            out_specs=pl.BlockSpec((tile, num_features), lambda i: (i, 0)),
        ),
        compiler_params=pltpu.CompilerParams(
            dimension_semantics=("parallel",),
        ),
    )(feats_2d, npts_col, sel)
    return out


def _reference(features, num_points, num_features=4):
    pts_mean = jnp.sum(features[:, :, :num_features].astype(jnp.float32), axis=1)
    return (pts_mean / num_points.astype(jnp.float32).reshape(-1, 1)).astype(features.dtype)


if __name__ == "__main__":
    key = jax.random.PRNGKey(0)
    k1, k2, k3, k4, k5, k6 = jax.random.split(key, 6)

    # Case 1: C == num_features.
    N, M, C = 200, 8, 4
    features = jax.random.normal(k1, (N, M, C), dtype=jnp.float32)
    num_points = jax.random.randint(k2, (N,), 1, M + 1, dtype=jnp.int32)
    out = jax.block_until_ready(hard_simple_vfe(features, num_points, coors=None, num_features=4))
    ref = _reference(features, num_points, num_features=4)
    assert out.shape == (N, 4)
    assert jnp.allclose(out, ref, atol=1e-4, rtol=1e-4), "mismatch vs reference (case 1)"

    # Case 2: C > num_features (channel slice handled by the selection matrix).
    N2, M2, C2 = 96, 8, 6
    features2 = jax.random.normal(k3, (N2, M2, C2), dtype=jnp.float32)
    num_points2 = jax.random.randint(k4, (N2,), 1, M2 + 1, dtype=jnp.int32)
    out2 = jax.block_until_ready(hard_simple_vfe(features2, num_points2, coors=None, num_features=4))
    ref2 = _reference(features2, num_points2, num_features=4)
    assert out2.shape == (N2, 4)
    assert jnp.allclose(out2, ref2, atol=1e-4, rtol=1e-4), "mismatch vs reference (case 2)"

    # Case 3: multi-step grid with a ragged tail (exercises clipped last block).
    N3, M3, C3 = 100, 8, 4
    features3 = jax.random.normal(k5, (N3, M3, C3), dtype=jnp.float32)
    num_points3 = jax.random.randint(k6, (N3,), 1, M3 + 1, dtype=jnp.int32)
    out3 = jax.block_until_ready(
        hard_simple_vfe(features3, num_points3, coors=None, num_features=4, tile_n=64))
    ref3 = _reference(features3, num_points3, num_features=4)
    assert out3.shape == (N3, 4)
    assert jnp.allclose(out3, ref3, atol=1e-4, rtol=1e-4), "mismatch vs reference (case 3)"

    print("KERNEL_OK")
</pallas_src>

<mosaic_0001>
module attributes {stable_mosaic.version = 11 : i64} {
  func.func @_vfe_kernel(%arg0: i32, %arg1: memref<200x32xf32, #tpu.memory_space<vmem>>, %arg2: memref<200x1xi32, #tpu.memory_space<vmem>>, %arg3: memref<32x4xf32, #tpu.memory_space<vmem>>, %arg4: memref<200x4xf32, #tpu.memory_space<vmem>>) attributes {dimension_semantics = [#tpu.dimension_semantics<parallel>], iteration_bounds = array<i64: 1>, scalar_prefetch = 0 : i64, scratch_operands = 0 : i64, tpu.core_type = #tpu.core_type<tc>, window_params = [{transform_indices = @transform_0, window_bounds = array<i64: 200, 32>}, {transform_indices = @transform_1, window_bounds = array<i64: 200, 1>}, {pipeline_mode = #tpu.pipeline_mode<synchronous>, transform_indices = @transform_2, window_bounds = array<i64: 32, 4>}, {transform_indices = @transform_3, window_bounds = array<i64: 200, 4>}]} {
    %c0 = arith.constant 0 : index
    %c0_0 = arith.constant 0 : index
    %0 = vector.load %arg1[%c0, %c0_0] : memref<200x32xf32, #tpu.memory_space<vmem>>, vector<200x32xf32>
    %c0_1 = arith.constant 0 : index
    %c0_2 = arith.constant 0 : index
    %1 = vector.load %arg3[%c0_1, %c0_2] : memref<32x4xf32, #tpu.memory_space<vmem>>, vector<32x4xf32>
    %cst = arith.constant dense<0.000000e+00> : vector<200x4xf32>
    %2 = tpu.matmul %0, %1, %cst {dimension_numbers = #tpu.dot_dimension_numbers<[1], [0], [0], [1], [0, 0, 1, 1], [], []>} : vector<200x32xf32>, vector<32x4xf32>, vector<200x4xf32> -> vector<200x4xf32>
    %c0_3 = arith.constant 0 : index
    %c0_4 = arith.constant 0 : index
    %3 = vector.load %arg2[%c0_3, %c0_4] : memref<200x1xi32, #tpu.memory_space<vmem>>, vector<200x1xi32>
    %4 = arith.sitofp %3 : vector<200x1xi32> to vector<200x1xf32>
    %5 = vector.broadcast %4 : vector<200x1xf32> to vector<200x4xf32>
    %6 = arith.divf %2, %5 : vector<200x4xf32>
    %c0_5 = arith.constant 0 : index
    %c0_6 = arith.constant 0 : index
    %7 = vector.load %arg4[%c0_5, %c0_6] : memref<200x4xf32, #tpu.memory_space<vmem>>, vector<200x4xf32>
    tpu.vector_store %arg4[%c0_5, %c0_6], %6 {strides = array<i32>} : memref<200x4xf32, #tpu.memory_space<vmem>>, vector<200x4xf32>,
    return
  }
  func.func @transform_0(%arg0: i32) -> (i32, i32) {
    %c0_i32 = arith.constant 0 : i32
    %c0_i32_0 = arith.constant 0 : i32
    return %arg0, %c0_i32 : i32, i32
  }
  func.func @transform_1(%arg0: i32) -> (i32, i32) {
    %c0_i32 = arith.constant 0 : i32
    %c0_i32_0 = arith.constant 0 : i32
    return %arg0, %c0_i32 : i32, i32
  }
  func.func @transform_2(%arg0: i32) -> (i32, i32) {
    %c0_i32 = arith.constant 0 : i32
    %c0_i32_0 = arith.constant 0 : i32
    %c0_i32_1 = arith.constant 0 : i32
    return %c0_i32, %c0_i32_0 : i32, i32
  }
  func.func @transform_3(%arg0: i32) -> (i32, i32) {
    %c0_i32 = arith.constant 0 : i32
    %c0_i32_0 = arith.constant 0 : i32
    return %arg0, %c0_i32 : i32, i32
  }
}

</mosaic_0001>

<llo_original>
// kernel: tpu_custom_call.1
$region0: #{tpu_custom_call.1}
  #allocation0 [shape = 'u32[]', space=smem, size = 0x4, offset = 0x4, fixed_abs, tag = 'smem constant byte address 0x4 - core index']
  #allocation1 [shape = 'u32[72,128]{1,0:T(1,128)}', space=vmem, size = 0x9000, scoped, tag = 'internal scratch']
  %s0 = inlined_call_operand.vmem [shape: f32[200,32], index: 0, kind: input, shape index: {}]
  %s1 = inlined_call_operand.vmem [shape: s32[200,1], index: 1, kind: input, shape index: {}]
  %s2 = inlined_call_operand.vmem [shape: f32[32,4], index: 2, kind: input, shape index: {}]
  %s3 = inlined_call_operand.vmem [shape: f32[200,4], index: 3, kind: output, shape index: {}]
  %s4 = sld [smem:[#allocation0]]
  $region22: #{tpu_custom_call.1} parent=0
    _
  %s6 = ssub.s32 1, %s4
  %s7 = scalar_select 0, %s6, %s4
  // Predicated region
  $region2: #{tpu_custom_call.1} parent=0 // pred_check
    _
  $region3: #{tpu_custom_call.1} parent=0 // pred_check_branch
    %9 = sbr.rel (0) target = $region5
  $region4: #{tpu_custom_call.1} parent=0 // pred_region
    _
  $region5: #{tpu_custom_call.1} parent=0 // pred_fallthru
    _
  // Predicated region
  $region6: #{tpu_custom_call.1} parent=0 // pred_check
    _
  $region7: #{tpu_custom_call.1} parent=0 // pred_check_branch
    %11 = sbr.rel (0) target = $region9
  $region8: #{tpu_custom_call.1} parent=0 // pred_region
    _
  $region9: #{tpu_custom_call.1} parent=0 // pred_fallthru
    _
  // Predicated region
  $region10: #{tpu_custom_call.1} parent=0 // pred_check
    _
  $region11: #{tpu_custom_call.1} parent=0 // pred_check_branch
    %13 = sbr.rel (0) target = $region13
  $region12: #{tpu_custom_call.1} parent=0 // pred_region
    _
  $region13: #{tpu_custom_call.1} parent=0 // pred_fallthru
    _
  %v14 = vld [vmem:[%s0] sm:$0xff]
  %v15 = vld [vmem:[%s0 + $0x8] sm:$0xff]
  %v16 = vld [vmem:[%s0 + $0x10] sm:$0xff]
  %v17 = vld [vmem:[%s0 + $0x18] sm:$0xff]
  %v18 = vld [vmem:[%s0 + $0x20] sm:$0xff]
  %v19 = vld [vmem:[%s0 + $0x28] sm:$0xff]
  %v20 = vld [vmem:[%s0 + $0x30] sm:$0xff]
  %v21 = vld [vmem:[%s0 + $0x38] sm:$0xff]
  %v22 = vld [vmem:[%s0 + $0x40] sm:$0xff]
  %v23 = vld [vmem:[%s0 + $0x48] sm:$0xff]
  %v24 = vld [vmem:[%s0 + $0x50] sm:$0xff]
  %v25 = vld [vmem:[%s0 + $0x58] sm:$0xff]
  %v26 = vld [vmem:[%s0 + $0x60] sm:$0xff]
  %v27 = vld [vmem:[%s0 + $0x68] sm:$0xff]
  %v28 = vld [vmem:[%s0 + $0x70] sm:$0xff]
  %v29 = vld [vmem:[%s0 + $0x78] sm:$0xff]
  %v30 = vld [vmem:[%s0 + $0x80] sm:$0xff]
  %v31 = vld [vmem:[%s0 + $0x88] sm:$0xff]
  %v32 = vld [vmem:[%s0 + $0x90] sm:$0xff]
  %v33 = vld [vmem:[%s0 + $0x98] sm:$0xff]
  %v34 = vld [vmem:[%s0 + $0xa0] sm:$0xff]
  %v35 = vld [vmem:[%s0 + $0xa8] sm:$0xff]
  %v36 = vld [vmem:[%s0 + $0xb0] sm:$0xff]
  %v37 = vld [vmem:[%s0 + $0xb8] sm:$0xff]
  %v38 = vld [vmem:[%s0 + $0xc0] sm:$0xff]
  %v39 = vld [vmem:[%s2] sm:$0xff]
  %v40 = vld [vmem:[%s2 + $0x8] sm:$0xff]
  %v41 = vld [vmem:[%s2 + $0x10] sm:$0xff]
  %v42 = vld [vmem:[%s2 + $0x18] sm:$0xff]
  %vm43 = vcmask 261120
  %v45 = vsel %vm43, %v14, 0
  %v48 = vsel %vm43, %v15, 0
  %v51 = vsel %vm43, %v16, 0
  %v54 = vsel %vm43, %v17, 0
  %v57 = vsel %vm43, %v18, 0
  %v60 = vsel %vm43, %v19, 0
  %v63 = vsel %vm43, %v20, 0
  %v66 = vsel %vm43, %v21, 0
  %v69 = vsel %vm43, %v22, 0
  %v72 = vsel %vm43, %v23, 0
  %v75 = vsel %vm43, %v24, 0
  %v78 = vsel %vm43, %v25, 0
  %v81 = vsel %vm43, %v26, 0
  %v84 = vsel %vm43, %v27, 0
  %v87 = vsel %vm43, %v28, 0
  %v90 = vsel %vm43, %v29, 0
  %v93 = vsel %vm43, %v30, 0
  %v96 = vsel %vm43, %v31, 0
  %v99 = vsel %vm43, %v32, 0
  %v102 = vsel %vm43, %v33, 0
  %v105 = vsel %vm43, %v34, 0
  %v108 = vsel %vm43, %v35, 0
  %v111 = vsel %vm43, %v36, 0
  %v114 = vsel %vm43, %v37, 0
  %v117 = vsel %vm43, %v38, 0
  %119 = vmatpush.msra.mxu0 0.0
  %120 = vmatpush.msra.mxu0 0.0
  %121 = vmatpush.msra.mxu0 0.0
  %122 = vmatpush.msra.mxu0 0.0
  %123 = vmatpush.msra.mxu0 0.0
  %124 = vmatpush.msra.mxu0 0.0
  %125 = vmatpush.msra.mxu0 0.0
  %126 = vmatpush.msra.mxu0 0.0
  %127 = vmatpush.msra.mxu0 0.0
  %128 = vmatpush.msra.mxu0 0.0
  %129 = vmatpush.msra.mxu0 0.0
  %130 = vmatpush.msra.mxu0 0.0
  %131 = vmatpush.msra.mxu0 %v42
  %132 = vmatpush.msra.mxu0 %v41
  %133 = vmatpush.msra.mxu0 %v40
  %134 = vmatpush.msra.mxu0 %v39
  %135 = vmatmul.f32.gmra.mxu0 %v45
  %v136 = vpop.f32.mrf.mxu0
  %v137 = vadd.f32 0.0, %v136
  %138 = vmatmul.f32.gmra.mxu0 %v48
  %v139 = vpop.f32.mrf.mxu0
  %v140 = vadd.f32 0.0, %v139
  %141 = vmatmul.f32.gmra.mxu0 %v51
  %v142 = vpop.f32.mrf.mxu0
  %v143 = vadd.f32 0.0, %v142
  %144 = vmatmul.f32.gmra.mxu0 %v54
  %v145 = vpop.f32.mrf.mxu0
  %v146 = vadd.f32 0.0, %v145
  %147 = vmatmul.f32.gmra.mxu0 %v57
  %v148 = vpop.f32.mrf.mxu0
  %v149 = vadd.f32 0.0, %v148
  %150 = vmatmul.f32.gmra.mxu0 %v60
  %v151 = vpop.f32.mrf.mxu0
  %v152 = vadd.f32 0.0, %v151
  %153 = vmatmul.f32.gmra.mxu0 %v63
  %v154 = vpop.f32.mrf.mxu0
  %v155 = vadd.f32 0.0, %v154
  %156 = vmatmul.f32.gmra.mxu0 %v66
  %v157 = vpop.f32.mrf.mxu0
  %v158 = vadd.f32 0.0, %v157
  %159 = vmatmul.f32.gmra.mxu0 %v69
  %v160 = vpop.f32.mrf.mxu0
  %v161 = vadd.f32 0.0, %v160
  %162 = vmatmul.f32.gmra.mxu0 %v72
  %v163 = vpop.f32.mrf.mxu0
  %v164 = vadd.f32 0.0, %v163
  %165 = vmatmul.f32.gmra.mxu0 %v75
  %v166 = vpop.f32.mrf.mxu0
  %v167 = vadd.f32 0.0, %v166
  %168 = vmatmul.f32.gmra.mxu0 %v78
  %v169 = vpop.f32.mrf.mxu0
  %v170 = vadd.f32 0.0, %v169
  %171 = vmatmul.f32.gmra.mxu0 %v81
  %v172 = vpop.f32.mrf.mxu0
  %v173 = vadd.f32 0.0, %v172
  %174 = vmatmul.f32.gmra.mxu0 %v84
  %v175 = vpop.f32.mrf.mxu0
  %v176 = vadd.f32 0.0, %v175
  %177 = vmatmul.f32.gmra.mxu0 %v87
  %v178 = vpop.f32.mrf.mxu0
  %v179 = vadd.f32 0.0, %v178
  %180 = vmatmul.f32.gmra.mxu0 %v90
  %v181 = vpop.f32.mrf.mxu0
  %v182 = vadd.f32 0.0, %v181
  %183 = vmatmul.f32.gmra.mxu0 %v93
  %v184 = vpop.f32.mrf.mxu0
  %v185 = vadd.f32 0.0, %v184
  %186 = vmatmul.f32.gmra.mxu0 %v96
  %v187 = vpop.f32.mrf.mxu0
  %v188 = vadd.f32 0.0, %v187
  %189 = vmatmul.f32.gmra.mxu0 %v99
  %v190 = vpop.f32.mrf.mxu0
  %v191 = vadd.f32 0.0, %v190
  %192 = vmatmul.f32.gmra.mxu0 %v102
  %v193 = vpop.f32.mrf.mxu0
  %v194 = vadd.f32 0.0, %v193
  %195 = vmatmul.f32.gmra.mxu0 %v105
  %v196 = vpop.f32.mrf.mxu0
  %v197 = vadd.f32 0.0, %v196
  %198 = vmatmul.f32.gmra.mxu0 %v108
  %v199 = vpop.f32.mrf.mxu0
  %v200 = vadd.f32 0.0, %v199
  %201 = vmatmul.f32.gmra.mxu0 %v111
  %v202 = vpop.f32.mrf.mxu0
  %v203 = vadd.f32 0.0, %v202
  %204 = vmatmul.f32.gmra.mxu0 %v114
  %v205 = vpop.f32.mrf.mxu0
  %v206 = vadd.f32 0.0, %v205
  %207 = vmatmul.f32.gmra.mxu0 %v117
  %v208 = vpop.f32.mrf.mxu0
  %v209 = vadd.f32 0.0, %v208
  %210 = vdwg.mxu0
  %v211 = vld [vmem:[%s1] sm:$0xff]
  %v212 = vld [vmem:[%s1 + $0x8] sm:$0xff]
  %v213 = vld [vmem:[%s1 + $0x10] sm:$0xff]
  %v214 = vld [vmem:[%s1 + $0x18] sm:$0xff]
  %v215 = vld [vmem:[%s1 + $0x20] sm:$0xff]
  %v216 = vld [vmem:[%s1 + $0x28] sm:$0xff]
  %v217 = vld [vmem:[%s1 + $0x30] sm:$0xff]
  %v218 = vld [vmem:[%s1 + $0x38] sm:$0xff]
  %v219 = vld [vmem:[%s1 + $0x40] sm:$0xff]
  %v220 = vld [vmem:[%s1 + $0x48] sm:$0xff]
  %v221 = vld [vmem:[%s1 + $0x50] sm:$0xff]
  %v222 = vld [vmem:[%s1 + $0x58] sm:$0xff]
  %v223 = vld [vmem:[%s1 + $0x60] sm:$0xff]
  %v224 = vld [vmem:[%s1 + $0x68] sm:$0xff]
  %v225 = vld [vmem:[%s1 + $0x70] sm:$0xff]
  %v226 = vld [vmem:[%s1 + $0x78] sm:$0xff]
  %v227 = vld [vmem:[%s1 + $0x80] sm:$0xff]
  %v228 = vld [vmem:[%s1 + $0x88] sm:$0xff]
  %v229 = vld [vmem:[%s1 + $0x90] sm:$0xff]
  %v230 = vld [vmem:[%s1 + $0x98] sm:$0xff]
  %v231 = vld [vmem:[%s1 + $0xa0] sm:$0xff]
  %v232 = vld [vmem:[%s1 + $0xa8] sm:$0xff]
  %v233 = vld [vmem:[%s1 + $0xb0] sm:$0xff]
  %v234 = vld [vmem:[%s1 + $0xb8] sm:$0xff]
  %v235 = vld [vmem:[%s1 + $0xc0] sm:$0xff]
  %v236 = vcvt.s32.f32 %v211
  %v237 = vcvt.s32.f32 %v212
  %v238 = vcvt.s32.f32 %v213
  %v239 = vcvt.s32.f32 %v214
  %v240 = vcvt.s32.f32 %v215
  %v241 = vcvt.s32.f32 %v216
  %v242 = vcvt.s32.f32 %v217
  %v243 = vcvt.s32.f32 %v218
  %v244 = vcvt.s32.f32 %v219
  %v245 = vcvt.s32.f32 %v220
  %v246 = vcvt.s32.f32 %v221
  %v247 = vcvt.s32.f32 %v222
  %v248 = vcvt.s32.f32 %v223
  %v249 = vcvt.s32.f32 %v224
  %v250 = vcvt.s32.f32 %v225
  %v251 = vcvt.s32.f32 %v226
  %v252 = vcvt.s32.f32 %v227
  %v253 = vcvt.s32.f32 %v228
  %v254 = vcvt.s32.f32 %v229
  %v255 = vcvt.s32.f32 %v230
  %v256 = vcvt.s32.f32 %v231
  %v257 = vcvt.s32.f32 %v232
  %v258 = vcvt.s32.f32 %v233
  %v259 = vcvt.s32.f32 %v234
  %v260 = vcvt.s32.f32 %v235
  %262 = vset.pattern.permute.xlu0 0
  %263 = vperm.xlu0 %262, %v236
  %v264 = vpop.permute.xlu0 %263
  %267 = vset.pattern.permute.xlu0 0
  %268 = vperm.xlu0 %267, %v237
  %v269 = vpop.permute.xlu0 %268
  %272 = vset.pattern.permute.xlu0 0
  %273 = vperm.xlu0 %272, %v238
  %v274 = vpop.permute.xlu0 %273
  %277 = vset.pattern.permute.xlu0 0
  %278 = vperm.xlu0 %277, %v239
  %v279 = vpop.permute.xlu0 %278
  %282 = vset.pattern.permute.xlu0 0
  %283 = vperm.xlu0 %282, %v240
  %v284 = vpop.permute.xlu0 %283
  %287 = vset.pattern.permute.xlu0 0
  %288 = vperm.xlu0 %287, %v241
  %v289 = vpop.permute.xlu0 %288
  %292 = vset.pattern.permute.xlu0 0
  %293 = vperm.xlu0 %292, %v242
  %v294 = vpop.permute.xlu0 %293
  %297 = vset.pattern.permute.xlu0 0
  %298 = vperm.xlu0 %297, %v243
  %v299 = vpop.permute.xlu0 %298
  %302 = vset.pattern.permute.xlu0 0
  %303 = vperm.xlu0 %302, %v244
  %v304 = vpop.permute.xlu0 %303
  %307 = vset.pattern.permute.xlu0 0
  %308 = vperm.xlu0 %307, %v245
  %v309 = vpop.permute.xlu0 %308
  %312 = vset.pattern.permute.xlu0 0
  %313 = vperm.xlu0 %312, %v246
  %v314 = vpop.permute.xlu0 %313
  %317 = vset.pattern.permute.xlu0 0
  %318 = vperm.xlu0 %317, %v247
  %v319 = vpop.permute.xlu0 %318
  %322 = vset.pattern.permute.xlu0 0
  %323 = vperm.xlu0 %322, %v248
  %v324 = vpop.permute.xlu0 %323
  %327 = vset.pattern.permute.xlu0 0
  %328 = vperm.xlu0 %327, %v249
  %v329 = vpop.permute.xlu0 %328
  %332 = vset.pattern.permute.xlu0 0
  %333 = vperm.xlu0 %332, %v250
  %v334 = vpop.permute.xlu0 %333
  %337 = vset.pattern.permute.xlu0 0
  %338 = vperm.xlu0 %337, %v251
  %v339 = vpop.permute.xlu0 %338
  %342 = vset.pattern.permute.xlu0 0
  %343 = vperm.xlu0 %342, %v252
  %v344 = vpop.permute.xlu0 %343
  %347 = vset.pattern.permute.xlu0 0
  %348 = vperm.xlu0 %347, %v253
  %v349 = vpop.permute.xlu0 %348
  %352 = vset.pattern.permute.xlu0 0
  %353 = vperm.xlu0 %352, %v254
  %v354 = vpop.permute.xlu0 %353
  %357 = vset.pattern.permute.xlu0 0
  %358 = vperm.xlu0 %357, %v255
  %v359 = vpop.permute.xlu0 %358
  %362 = vset.pattern.permute.xlu0 0
  %363 = vperm.xlu0 %362, %v256
  %v364 = vpop.permute.xlu0 %363
  %367 = vset.pattern.permute.xlu0 0
  %368 = vperm.xlu0 %367, %v257
  %v369 = vpop.permute.xlu0 %368
  %372 = vset.pattern.permute.xlu0 0
  %373 = vperm.xlu0 %372, %v258
  %v374 = vpop.permute.xlu0 %373
  %377 = vset.pattern.permute.xlu0 0
  %378 = vperm.xlu0 %377, %v259
  %v379 = vpop.permute.xlu0 %378
  %382 = vset.pattern.permute.xlu0 0
  %383 = vperm.xlu0 %382, %v260
  %v384 = vpop.permute.xlu0 %383
  %v386 = vrcp.pop %v264
  %v387 = vmul.f32 %v264, %v386
  %v388 = vsub.f32 1.0, %v387
  %v389 = vmul.f32 %v386, %v388
  %v390 = vadd.f32 %v386, %v389
  %vm391 = vweird.f32 %v264
  %vm392 = vweird.f32 %v386
  %vm393 = vmor %vm391, %vm392
  %v394 = vsel %vm393, %v386, %v390
  %v395 = vand.u32 2147483647, %v264
  %vm396 = vcmp.eq.f32.partialorder %v395, 8.507059e+37
  %v397 = vand.u32 %v264, 2147483648
  %v398 = vor.u32 1.1754944e-38, %v397
  %v399 = vsel %vm396, %v398, %v394
  %v400 = vmul.f32 %v137, %v399
  %v401 = vrcp.pop %v269
  %v402 = vmul.f32 %v269, %v401
  %v403 = vsub.f32 1.0, %v402
  %v404 = vmul.f32 %v401, %v403
  %v405 = vadd.f32 %v401, %v404
  %vm406 = vweird.f32 %v269
  %vm407 = vweird.f32 %v401
  %vm408 = vmor %vm406, %vm407
  %v409 = vsel %vm408, %v401, %v405
  %v410 = vand.u32 2147483647, %v269
  %vm411 = vcmp.eq.f32.partialorder %v410, 8.507059e+37
  %v412 = vand.u32 %v269, 2147483648
  %v413 = vor.u32 1.1754944e-38, %v412
  %v414 = vsel %vm411, %v413, %v409
  %v415 = vmul.f32 %v140, %v414
  %v416 = vrcp.pop %v274
  %v417 = vmul.f32 %v274, %v416
  %v418 = vsub.f32 1.0, %v417
  %v419 = vmul.f32 %v416, %v418
  %v420 = vadd.f32 %v416, %v419
  %vm421 = vweird.f32 %v274
  %vm422 = vweird.f32 %v416
  %vm423 = vmor %vm421, %vm422
  %v424 = vsel %vm423, %v416, %v420
  %v425 = vand.u32 2147483647, %v274
  %vm426 = vcmp.eq.f32.partialorder %v425, 8.507059e+37
  %v427 = vand.u32 %v274, 2147483648
  %v428 = vor.u32 1.1754944e-38, %v427
  %v429 = vsel %vm426, %v428, %v424
  %v430 = vmul.f32 %v143, %v429
  %v431 = vrcp.pop %v279
  %v432 = vmul.f32 %v279, %v431
  %v433 = vsub.f32 1.0, %v432
  %v434 = vmul.f32 %v431, %v433
  %v435 = vadd.f32 %v431, %v434
  %vm436 = vweird.f32 %v279
  %vm437 = vweird.f32 %v431
  %vm438 = vmor %vm436, %vm437
  %v439 = vsel %vm438, %v431, %v435
  %v440 = vand.u32 2147483647, %v279
  %vm441 = vcmp.eq.f32.partialorder %v440, 8.507059e+37
  %v442 = vand.u32 %v279, 2147483648
  %v443 = vor.u32 1.1754944e-38, %v442
  %v444 = vsel %vm441, %v443, %v439
  %v445 = vmul.f32 %v146, %v444
  %v446 = vrcp.pop %v284
  %v447 = vmul.f32 %v284, %v446
  %v448 = vsub.f32 1.0, %v447
  %v449 = vmul.f32 %v446, %v448
  %v450 = vadd.f32 %v446, %v449
  %vm451 = vweird.f32 %v284
  %vm452 = vweird.f32 %v446
  %vm453 = vmor %vm451, %vm452
  %v454 = vsel %vm453, %v446, %v450
  %v455 = vand.u32 2147483647, %v284
  %vm456 = vcmp.eq.f32.partialorder %v455, 8.507059e+37
  %v457 = vand.u32 %v284, 2147483648
  %v458 = vor.u32 1.1754944e-38, %v457
  %v459 = vsel %vm456, %v458, %v454
  %v460 = vmul.f32 %v149, %v459
  %v461 = vrcp.pop %v289
  %v462 = vmul.f32 %v289, %v461
  %v463 = vsub.f32 1.0, %v462
  %v464 = vmul.f32 %v461, %v463
  %v465 = vadd.f32 %v461, %v464
  %vm466 = vweird.f32 %v289
  %vm467 = vweird.f32 %v461
  %vm468 = vmor %vm466, %vm467
  %v469 = vsel %vm468, %v461, %v465
  %v470 = vand.u32 2147483647, %v289
  %vm471 = vcmp.eq.f32.partialorder %v470, 8.507059e+37
  %v472 = vand.u32 %v289, 2147483648
  %v473 = vor.u32 1.1754944e-38, %v472
  %v474 = vsel %vm471, %v473, %v469
  %v475 = vmul.f32 %v152, %v474
  %v476 = vrcp.pop %v294
  %v477 = vmul.f32 %v294, %v476
  %v478 = vsub.f32 1.0, %v477
  %v479 = vmul.f32 %v476, %v478
  %v480 = vadd.f32 %v476, %v479
  %vm481 = vweird.f32 %v294
  %vm482 = vweird.f32 %v476
  %vm483 = vmor %vm481, %vm482
  %v484 = vsel %vm483, %v476, %v480
  %v485 = vand.u32 2147483647, %v294
  %vm486 = vcmp.eq.f32.partialorder %v485, 8.507059e+37
  %v487 = vand.u32 %v294, 2147483648
  %v488 = vor.u32 1.1754944e-38, %v487
  %v489 = vsel %vm486, %v488, %v484
  %v490 = vmul.f32 %v155, %v489
  %v491 = vrcp.pop %v299
  %v492 = vmul.f32 %v299, %v491
  %v493 = vsub.f32 1.0, %v492
  %v494 = vmul.f32 %v491, %v493
  %v495 = vadd.f32 %v491, %v494
  %vm496 = vweird.f32 %v299
  %vm497 = vweird.f32 %v491
  %vm498 = vmor %vm496, %vm497
  %v499 = vsel %vm498, %v491, %v495
  %v500 = vand.u32 2147483647, %v299
  %vm501 = vcmp.eq.f32.partialorder %v500, 8.507059e+37
  %v502 = vand.u32 %v299, 2147483648
  %v503 = vor.u32 1.1754944e-38, %v502
  %v504 = vsel %vm501, %v503, %v499
  %v505 = vmul.f32 %v158, %v504
  %v506 = vrcp.pop %v304
  %v507 = vmul.f32 %v304, %v506
  %v508 = vsub.f32 1.0, %v507
  %v509 = vmul.f32 %v506, %v508
  %v510 = vadd.f32 %v506, %v509
  %vm511 = vweird.f32 %v304
  %vm512 = vweird.f32 %v506
  %vm513 = vmor %vm511, %vm512
  %v514 = vsel %vm513, %v506, %v510
  %v515 = vand.u32 2147483647, %v304
  %vm516 = vcmp.eq.f32.partialorder %v515, 8.507059e+37
  %v517 = vand.u32 %v304, 2147483648
  %v518 = vor.u32 1.1754944e-38, %v517
  %v519 = vsel %vm516, %v518, %v514
  %v520 = vmul.f32 %v161, %v519
  %v521 = vrcp.pop %v309
  %v522 = vmul.f32 %v309, %v521
  %v523 = vsub.f32 1.0, %v522
  %v524 = vmul.f32 %v521, %v523
  %v525 = vadd.f32 %v521, %v524
  %vm526 = vweird.f32 %v309
  %vm527 = vweird.f32 %v521
  %vm528 = vmor %vm526, %vm527
  %v529 = vsel %vm528, %v521, %v525
  %v530 = vand.u32 2147483647, %v309
  %vm531 = vcmp.eq.f32.partialorder %v530, 8.507059e+37
  %v532 = vand.u32 %v309, 2147483648
  %v533 = vor.u32 1.1754944e-38, %v532
  %v534 = vsel %vm531, %v533, %v529
  %v535 = vmul.f32 %v164, %v534
  %v536 = vrcp.pop %v314
  %v537 = vmul.f32 %v314, %v536
  %v538 = vsub.f32 1.0, %v537
  %v539 = vmul.f32 %v536, %v538
  %v540 = vadd.f32 %v536, %v539
  %vm541 = vweird.f32 %v314
  %vm542 = vweird.f32 %v536
  %vm543 = vmor %vm541, %vm542
  %v544 = vsel %vm543, %v536, %v540
  %v545 = vand.u32 2147483647, %v314
  %vm546 = vcmp.eq.f32.partialorder %v545, 8.507059e+37
  %v547 = vand.u32 %v314, 2147483648
  %v548 = vor.u32 1.1754944e-38, %v547
  %v549 = vsel %vm546, %v548, %v544
  %v550 = vmul.f32 %v167, %v549
  %v551 = vrcp.pop %v319
  %v552 = vmul.f32 %v319, %v551
  %v553 = vsub.f32 1.0, %v552
  %v554 = vmul.f32 %v551, %v553
  %v555 = vadd.f32 %v551, %v554
  %vm556 = vweird.f32 %v319
  %vm557 = vweird.f32 %v551
  %vm558 = vmor %vm556, %vm557
  %v559 = vsel %vm558, %v551, %v555
  %v560 = vand.u32 2147483647, %v319
  %vm561 = vcmp.eq.f32.partialorder %v560, 8.507059e+37
  %v562 = vand.u32 %v319, 2147483648
  %v563 = vor.u32 1.1754944e-38, %v562
  %v564 = vsel %vm561, %v563, %v559
  %v565 = vmul.f32 %v170, %v564
  %v566 = vrcp.pop %v324
  %v567 = vmul.f32 %v324, %v566
  %v568 = vsub.f32 1.0, %v567
  %v569 = vmul.f32 %v566, %v568
  %v570 = vadd.f32 %v566, %v569
  %vm571 = vweird.f32 %v324
  %vm572 = vweird.f32 %v566
  %vm573 = vmor %vm571, %vm572
  %v574 = vsel %vm573, %v566, %v570
  %v575 = vand.u32 2147483647, %v324
  %vm576 = vcmp.eq.f32.partialorder %v575, 8.507059e+37
  %v577 = vand.u32 %v324, 2147483648
  %v578 = vor.u32 1.1754944e-38, %v577
  %v579 = vsel %vm576, %v578, %v574
  %v580 = vmul.f32 %v173, %v579
  %v581 = vrcp.pop %v329
  %v582 = vmul.f32 %v329, %v581
  %v583 = vsub.f32 1.0, %v582
  %v584 = vmul.f32 %v581, %v583
  %v585 = vadd.f32 %v581, %v584
  %vm586 = vweird.f32 %v329
  %vm587 = vweird.f32 %v581
  %vm588 = vmor %vm586, %vm587
  %v589 = vsel %vm588, %v581, %v585
  %v590 = vand.u32 2147483647, %v329
  %vm591 = vcmp.eq.f32.partialorder %v590, 8.507059e+37
  %v592 = vand.u32 %v329, 2147483648
  %v593 = vor.u32 1.1754944e-38, %v592
  %v594 = vsel %vm591, %v593, %v589
  %v595 = vmul.f32 %v176, %v594
  %v596 = vrcp.pop %v334
  %v597 = vmul.f32 %v334, %v596
  %v598 = vsub.f32 1.0, %v597
  %v599 = vmul.f32 %v596, %v598
  %v600 = vadd.f32 %v596, %v599
  %vm601 = vweird.f32 %v334
  %vm602 = vweird.f32 %v596
  %vm603 = vmor %vm601, %vm602
  %v604 = vsel %vm603, %v596, %v600
  %v605 = vand.u32 2147483647, %v334
  %vm606 = vcmp.eq.f32.partialorder %v605, 8.507059e+37
  %v607 = vand.u32 %v334, 2147483648
  %v608 = vor.u32 1.1754944e-38, %v607
  %v609 = vsel %vm606, %v608, %v604
  %v610 = vmul.f32 %v179, %v609
  %v611 = vrcp.pop %v339
  %v612 = vmul.f32 %v339, %v611
  %v613 = vsub.f32 1.0, %v612
  %v614 = vmul.f32 %v611, %v613
  %v615 = vadd.f32 %v611, %v614
  %vm616 = vweird.f32 %v339
  %vm617 = vweird.f32 %v611
  %vm618 = vmor %vm616, %vm617
  %v619 = vsel %vm618, %v611, %v615
  %v620 = vand.u32 2147483647, %v339
  %vm621 = vcmp.eq.f32.partialorder %v620, 8.507059e+37
  %v622 = vand.u32 %v339, 2147483648
  %v623 = vor.u32 1.1754944e-38, %v622
  %v624 = vsel %vm621, %v623, %v619
  %v625 = vmul.f32 %v182, %v624
  %v626 = vrcp.pop %v344
  %v627 = vmul.f32 %v344, %v626
  %v628 = vsub.f32 1.0, %v627
  %v629 = vmul.f32 %v626, %v628
  %v630 = vadd.f32 %v626, %v629
  %vm631 = vweird.f32 %v344
  %vm632 = vweird.f32 %v626
  %vm633 = vmor %vm631, %vm632
  %v634 = vsel %vm633, %v626, %v630
  %v635 = vand.u32 2147483647, %v344
  %vm636 = vcmp.eq.f32.partialorder %v635, 8.507059e+37
  %v637 = vand.u32 %v344, 2147483648
  %v638 = vor.u32 1.1754944e-38, %v637
  %v639 = vsel %vm636, %v638, %v634
  %v640 = vmul.f32 %v185, %v639
  %v641 = vrcp.pop %v349
  %v642 = vmul.f32 %v349, %v641
  %v643 = vsub.f32 1.0, %v642
  %v644 = vmul.f32 %v641, %v643
  %v645 = vadd.f32 %v641, %v644
  %vm646 = vweird.f32 %v349
  %vm647 = vweird.f32 %v641
  %vm648 = vmor %vm646, %vm647
  %v649 = vsel %vm648, %v641, %v645
  %v650 = vand.u32 2147483647, %v349
  %vm651 = vcmp.eq.f32.partialorder %v650, 8.507059e+37
  %v652 = vand.u32 %v349, 2147483648
  %v653 = vor.u32 1.1754944e-38, %v652
  %v654 = vsel %vm651, %v653, %v649
  %v655 = vmul.f32 %v188, %v654
  %v656 = vrcp.pop %v354
  %v657 = vmul.f32 %v354, %v656
  %v658 = vsub.f32 1.0, %v657
  %v659 = vmul.f32 %v656, %v658
  %v660 = vadd.f32 %v656, %v659
  %vm661 = vweird.f32 %v354
  %vm662 = vweird.f32 %v656
  %vm663 = vmor %vm661, %vm662
  %v664 = vsel %vm663, %v656, %v660
  %v665 = vand.u32 2147483647, %v354
  %vm666 = vcmp.eq.f32.partialorder %v665, 8.507059e+37
  %v667 = vand.u32 %v354, 2147483648
  %v668 = vor.u32 1.1754944e-38, %v667
  %v669 = vsel %vm666, %v668, %v664
  %v670 = vmul.f32 %v191, %v669
  %v671 = vrcp.pop %v359
  %v672 = vmul.f32 %v359, %v671
  %v673 = vsub.f32 1.0, %v672
  %v674 = vmul.f32 %v671, %v673
  %v675 = vadd.f32 %v671, %v674
  %vm676 = vweird.f32 %v359
  %vm677 = vweird.f32 %v671
  %vm678 = vmor %vm676, %vm677
  %v679 = vsel %vm678, %v671, %v675
  %v680 = vand.u32 2147483647, %v359
  %vm681 = vcmp.eq.f32.partialorder %v680, 8.507059e+37
  %v682 = vand.u32 %v359, 2147483648
  %v683 = vor.u32 1.1754944e-38, %v682
  %v684 = vsel %vm681, %v683, %v679
  %v685 = vmul.f32 %v194, %v684
  %v686 = vrcp.pop %v364
  %v687 = vmul.f32 %v364, %v686
  %v688 = vsub.f32 1.0, %v687
  %v689 = vmul.f32 %v686, %v688
  %v690 = vadd.f32 %v686, %v689
  %vm691 = vweird.f32 %v364
  %vm692 = vweird.f32 %v686
  %vm693 = vmor %vm691, %vm692
  %v694 = vsel %vm693, %v686, %v690
  %v695 = vand.u32 2147483647, %v364
  %vm696 = vcmp.eq.f32.partialorder %v695, 8.507059e+37
  %v697 = vand.u32 %v364, 2147483648
  %v698 = vor.u32 1.1754944e-38, %v697
  %v699 = vsel %vm696, %v698, %v694
  %v700 = vmul.f32 %v197, %v699
  %v701 = vrcp.pop %v369
  %v702 = vmul.f32 %v369, %v701
  %v703 = vsub.f32 1.0, %v702
  %v704 = vmul.f32 %v701, %v703
  %v705 = vadd.f32 %v701, %v704
  %vm706 = vweird.f32 %v369
  %vm707 = vweird.f32 %v701
  %vm708 = vmor %vm706, %vm707
  %v709 = vsel %vm708, %v701, %v705
  %v710 = vand.u32 2147483647, %v369
  %vm711 = vcmp.eq.f32.partialorder %v710, 8.507059e+37
  %v712 = vand.u32 %v369, 2147483648
  %v713 = vor.u32 1.1754944e-38, %v712
  %v714 = vsel %vm711, %v713, %v709
  %v715 = vmul.f32 %v200, %v714
  %v716 = vrcp.pop %v374
  %v717 = vmul.f32 %v374, %v716
  %v718 = vsub.f32 1.0, %v717
  %v719 = vmul.f32 %v716, %v718
  %v720 = vadd.f32 %v716, %v719
  %vm721 = vweird.f32 %v374
  %vm722 = vweird.f32 %v716
  %vm723 = vmor %vm721, %vm722
  %v724 = vsel %vm723, %v716, %v720
  %v725 = vand.u32 2147483647, %v374
  %vm726 = vcmp.eq.f32.partialorder %v725, 8.507059e+37
  %v727 = vand.u32 %v374, 2147483648
  %v728 = vor.u32 1.1754944e-38, %v727
  %v729 = vsel %vm726, %v728, %v724
  %v730 = vmul.f32 %v203, %v729
  %v731 = vrcp.pop %v379
  %v732 = vmul.f32 %v379, %v731
  %v733 = vsub.f32 1.0, %v732
  %v734 = vmul.f32 %v731, %v733
  %v735 = vadd.f32 %v731, %v734
  %vm736 = vweird.f32 %v379
  %vm737 = vweird.f32 %v731
  %vm738 = vmor %vm736, %vm737
  %v739 = vsel %vm738, %v731, %v735
  %v740 = vand.u32 2147483647, %v379
  %vm741 = vcmp.eq.f32.partialorder %v740, 8.507059e+37
  %v742 = vand.u32 %v379, 2147483648
  %v743 = vor.u32 1.1754944e-38, %v742
  %v744 = vsel %vm741, %v743, %v739
  %v745 = vmul.f32 %v206, %v744
  %v746 = vrcp.pop %v384
  %v747 = vmul.f32 %v384, %v746
  %v748 = vsub.f32 1.0, %v747
  %v749 = vmul.f32 %v746, %v748
  %v750 = vadd.f32 %v746, %v749
  %vm751 = vweird.f32 %v384
  %vm752 = vweird.f32 %v746
  %vm753 = vmor %vm751, %vm752
  %v754 = vsel %vm753, %v746, %v750
  %v755 = vand.u32 2147483647, %v384
  %vm756 = vcmp.eq.f32.partialorder %v755, 8.507059e+37
  %v757 = vand.u32 %v384, 2147483648
  %v758 = vor.u32 1.1754944e-38, %v757
  %v759 = vsel %vm756, %v758, %v754
  %v760 = vmul.f32 %v209, %v759
  %vm761 = vcmask 31744
  %762 = vst.msk [vmem:[%s3] sm:$0xff] %vm761, %v400
  %763 = vst.msk [vmem:[%s3 + $0x8] sm:$0xff] %vm761, %v415
  %764 = vst.msk [vmem:[%s3 + $0x10] sm:$0xff] %vm761, %v430
  %765 = vst.msk [vmem:[%s3 + $0x18] sm:$0xff] %vm761, %v445
  %766 = vst.msk [vmem:[%s3 + $0x20] sm:$0xff] %vm761, %v460
  %767 = vst.msk [vmem:[%s3 + $0x28] sm:$0xff] %vm761, %v475
  %768 = vst.msk [vmem:[%s3 + $0x30] sm:$0xff] %vm761, %v490
  %769 = vst.msk [vmem:[%s3 + $0x38] sm:$0xff] %vm761, %v505
  %770 = vst.msk [vmem:[%s3 + $0x40] sm:$0xff] %vm761, %v520
  %771 = vst.msk [vmem:[%s3 + $0x48] sm:$0xff] %vm761, %v535
  %772 = vst.msk [vmem:[%s3 + $0x50] sm:$0xff] %vm761, %v550
  %773 = vst.msk [vmem:[%s3 + $0x58] sm:$0xff] %vm761, %v565
  %774 = vst.msk [vmem:[%s3 + $0x60] sm:$0xff] %vm761, %v580
  %775 = vst.msk [vmem:[%s3 + $0x68] sm:$0xff] %vm761, %v595
  %776 = vst.msk [vmem:[%s3 + $0x70] sm:$0xff] %vm761, %v610
  %777 = vst.msk [vmem:[%s3 + $0x78] sm:$0xff] %vm761, %v625
  %778 = vst.msk [vmem:[%s3 + $0x80] sm:$0xff] %vm761, %v640
  %779 = vst.msk [vmem:[%s3 + $0x88] sm:$0xff] %vm761, %v655
  %780 = vst.msk [vmem:[%s3 + $0x90] sm:$0xff] %vm761, %v670
  %781 = vst.msk [vmem:[%s3 + $0x98] sm:$0xff] %vm761, %v685
  %782 = vst.msk [vmem:[%s3 + $0xa0] sm:$0xff] %vm761, %v700
  %783 = vst.msk [vmem:[%s3 + $0xa8] sm:$0xff] %vm761, %v715
  %784 = vst.msk [vmem:[%s3 + $0xb0] sm:$0xff] %vm761, %v730
  %785 = vst.msk [vmem:[%s3 + $0xb8] sm:$0xff] %vm761, %v745
  %786 = vst.msk [vmem:[%s3 + $0xc0] sm:$0xff] %vm761, %v760
  // Predicated region
  $region14: #{tpu_custom_call.1} parent=0 // pred_check
    _
  $region15: #{tpu_custom_call.1} parent=0 // pred_check_branch
    %788 = sbr.rel (0) target = $region17
  $region16: #{tpu_custom_call.1} parent=0 // pred_region
    _
  $region17: #{tpu_custom_call.1} parent=0 // pred_fallthru
    _
  // Predicated region
  $region18: #{tpu_custom_call.1} parent=0 // pred_check
    _
  $region19: #{tpu_custom_call.1} parent=0 // pred_check_branch
    %790 = sbr.rel (0) target = $region21
  $region20: #{tpu_custom_call.1} parent=0 // pred_region
    _
  $region21: #{tpu_custom_call.1} parent=0 // pred_fallthru
    _

</llo_original>
